<compile_context>
chip_gen: v7x
topology: tpu7x:2x2x1
jax: 0.10.0
libtpu: 0.0.40
codegen_flags: <defaults>
</compile_context>

<pallas_src>
import numpy as np
import jax
import jax.numpy as jnp
from jax import lax
from jax.experimental import pallas as pl
from jax.experimental.pallas import tpu as pltpu

# ---------------- small config, consistent with the module ----------------
BATCH = 2
C_IN = 4                  # in_channels
IMG = 18                  # input spatial size -> Ho = Wo = (18-3)//2 + 1 = 8
KSIZE = 3                 # kernel_size (module default)
STRIDE = 2                # hard-coded in the module
NUM_CAPSULES = 8          # module default
OUT_CH = 32               # out_channels per capsule (module default)

H_OUT = (IMG - KSIZE) // STRIDE + 1            # 8
W_OUT = (IMG - KSIZE) // STRIDE + 1            # 8
HW = H_OUT * W_OUT                             # 64 (multiple of 8 -> routes are lane-aligned)
M = NUM_CAPSULES * OUT_CH                      # 256 fused conv output channels
KDIM = C_IN * KSIZE * KSIZE                    # 36 im2col feature dim
KAUG = KDIM + 1                                # 37 (extra row of ones carries the bias)
CAP_DIM = NUM_CAPSULES                         # 8  trailing capsule-vector length
NUM_ROUTES = OUT_CH * HW                       # 2048 (torch: caps*out_ch*Ho*Wo / 8)
N_COLS = BATCH * HW                            # 128 -> exactly one lane width
EPS = 1e-9

assert HW % CAP_DIM == 0, "route groups must not straddle channel rows"
assert N_COLS % 128 == 0, "output columns should be lane-dense"

VMEM = pl.BlockSpec(memory_space=pltpu.MemorySpace.VMEM)


# ---------------- Pallas kernel ----------------
def _primary_caps_kernel(p_ref, w_ref, g_ref, o_ref):
    """Fused PrimaryCaps: 8 convs + bias (one matmul) + per-route squash.

    p_ref : (KAUG, N_COLS)  bf16  im2col patches + ones row, cols = (batch, h*Wo+w)
    w_ref : (M, KAUG)       bf16  fused conv weights + bias column, rows = (capsule, out_ch)
    g_ref : (N_COLS, N_COLS) bf16 block-diagonal 0/1 route-group matrix
    o_ref : (M, N_COLS)     f32   squashed output in NCHW-flat order (column-blocked by batch)
    """
    # All 8 capsule convs + bias, whole batch, in one MXU matmul (bf16 in, f32 acc).
    c = jnp.dot(w_ref[...], p_ref[...], preferred_element_type=jnp.float32)  # (M, N)

    # Each route's 8 elements are 8 consecutive lanes of one row (CAP_DIM | HW,
    # and the batch seam at lane 64 sits on a group boundary).  One bf16
    # block-diagonal matmul computes every lane's route squared-norm AND
    # broadcasts it back over the route -- MXU work, no lane shuffles.
    cc = (c * c).astype(jnp.bfloat16)
    sq = jnp.dot(cc, g_ref[...], preferred_element_type=jnp.float32)         # (M, N)

    # squash: u * |u| / (1 + |u|^2); rsqrt + approx reciprocal run on the EUP,
    # eps avoids 0/0 -> NaN for zero vectors.
    scale = sq * lax.rsqrt(sq + EPS) * pl.reciprocal(1.0 + sq, approx=True)
    o_ref[...] = c * scale                                                    # single unmasked store


# ---------------- wrapper ----------------
def _im2col_t(x):
    """NCHW input -> (KDIM, BATCH*HW) patches; k order (c, dy, dx) matches OIHW flatten."""
    cols = []
    for dy in range(KSIZE):
        for dx in range(KSIZE):
            cols.append(x[:, :, dy:dy + STRIDE * H_OUT:STRIDE,
                          dx:dx + STRIDE * W_OUT:STRIDE])      # (B, C, Ho, Wo)
    p = jnp.stack(cols, axis=2)                                # (B, C, k*k, Ho, Wo)
    p = p.reshape(BATCH, KDIM, HW)                             # k = c*9 + dy*3 + dx
    return jnp.transpose(p, (1, 0, 2)).reshape(KDIM, N_COLS)


@jax.jit
def primary_caps_forward(x, conv_w, conv_b):
    """x: (B, C_IN, IMG, IMG); conv_w: (caps, out_ch, C_IN, k, k); conv_b: (caps, out_ch)."""
    # Patches augmented with a ones row; weights augmented with the bias column.
    patches = _im2col_t(x)                                              # (KDIM, N) f32
    p_aug = jnp.concatenate(
        [patches, jnp.ones((1, N_COLS), patches.dtype)], axis=0
    ).astype(jnp.bfloat16)                                              # (KAUG, N)
    w_aug = jnp.concatenate(
        [conv_w.reshape(M, KDIM), conv_b.reshape(M, 1)], axis=1
    ).astype(jnp.bfloat16)                                              # (M, KAUG)

    # Block-diagonal route-group matrix (constant; XLA folds it at compile time).
    group = jnp.kron(jnp.eye(N_COLS // CAP_DIM, dtype=jnp.float32),
                     jnp.ones((CAP_DIM, CAP_DIM), jnp.float32)).astype(jnp.bfloat16)

    out = pl.pallas_call(
        _primary_caps_kernel,
        out_shape=jax.ShapeDtypeStruct((M, N_COLS), jnp.float32),
        in_specs=[VMEM, VMEM, VMEM],
        out_specs=VMEM,
    )(p_aug, w_aug, group)

    # (M, BATCH*HW) -> torch's stack(dim=1).view(B, num_routes, 8) order:
    # column = b*HW + g*8 + d, row m = caps*32 + out_ch, route = m*8 + g.
    out = out.reshape(M, BATCH, HW // CAP_DIM, CAP_DIM)
    return jnp.transpose(out, (1, 0, 2, 3)).reshape(BATCH, NUM_ROUTES, CAP_DIM)


# ---------------- pure-JAX reference (tolerance check) ----------------
def primary_caps_reference(x, conv_w, conv_b):
    # Quantize matmul operands (incl. folded bias) to bf16 like the kernel; math in f32.
    xq = x.astype(jnp.bfloat16).astype(jnp.float32)
    wq = conv_w.astype(jnp.bfloat16).astype(jnp.float32)
    bq = conv_b.astype(jnp.bfloat16).astype(jnp.float32)
    us = []
    for cap in range(NUM_CAPSULES):
        o = lax.conv_general_dilated(
            xq, wq[cap], window_strides=(STRIDE, STRIDE), padding="VALID",
            dimension_numbers=("NCHW", "OIHW", "NCHW"))
        us.append(o + bq[cap][None, :, None, None])
    u = jnp.stack(us, axis=1)                          # (B, caps, out_ch, Ho, Wo)
    u = u.reshape(x.shape[0], NUM_ROUTES, -1)          # torch: u.view(B, num_routes, -1)
    sq = jnp.sum(u * u, axis=-1, keepdims=True)
    return sq * u / ((1.0 + sq) * jnp.sqrt(sq + EPS))


# ---------------- main ----------------
if __name__ == "__main__":
    key = jax.random.PRNGKey(0)
    kx, kw, kb = jax.random.split(key, 3)
    x = jax.random.normal(kx, (BATCH, C_IN, IMG, IMG), jnp.float32)
    conv_w = 0.1 * jax.random.normal(
        kw, (NUM_CAPSULES, OUT_CH, C_IN, KSIZE, KSIZE), jnp.float32)
    conv_b = 0.1 * jax.random.normal(kb, (NUM_CAPSULES, OUT_CH), jnp.float32)

    out = primary_caps_forward(x, conv_w, conv_b)
    jax.block_until_ready(out)
    assert out.shape == (BATCH, NUM_ROUTES, CAP_DIM)

    ref = primary_caps_reference(x, conv_w, conv_b)
    np.testing.assert_allclose(np.asarray(out), np.asarray(ref), rtol=0.05, atol=1e-2)
    print("KERNEL_OK")
</pallas_src>

<mosaic_0001>
module attributes {stable_mosaic.version = 11 : i64} {
  func.func @_primary_caps_kernel(%arg0: memref<37x128xbf16, #tpu.memory_space<vmem>>, %arg1: memref<256x37xbf16, #tpu.memory_space<vmem>>, %arg2: memref<128x128xbf16, #tpu.memory_space<vmem>>, %arg3: memref<256x128xf32, #tpu.memory_space<vmem>>) attributes {dimension_semantics = [], scalar_prefetch = 0 : i64, scratch_operands = 0 : i64, tpu.core_type = #tpu.core_type<tc>} {
    %c0 = arith.constant 0 : index
    %c0_0 = arith.constant 0 : index
    %0 = vector.load %arg1[%c0, %c0_0] : memref<256x37xbf16, #tpu.memory_space<vmem>>, vector<256x37xbf16>
    %c0_1 = arith.constant 0 : index
    %c0_2 = arith.constant 0 : index
    %1 = vector.load %arg0[%c0_1, %c0_2] : memref<37x128xbf16, #tpu.memory_space<vmem>>, vector<37x128xbf16>
    %cst = arith.constant dense<0.000000e+00> : vector<256x128xf32>
    %2 = tpu.matmul %0, %1, %cst {dimension_numbers = #tpu.dot_dimension_numbers<[1], [0], [0], [1], [0, 0, 1, 1], [], []>} : vector<256x37xbf16>, vector<37x128xbf16>, vector<256x128xf32> -> vector<256x128xf32>
    %3 = arith.mulf %2, %2 : vector<256x128xf32>
    %4 = arith.truncf %3 : vector<256x128xf32> to vector<256x128xbf16>
    %c0_3 = arith.constant 0 : index
    %c0_4 = arith.constant 0 : index
    %5 = vector.load %arg2[%c0_3, %c0_4] : memref<128x128xbf16, #tpu.memory_space<vmem>>, vector<128x128xbf16>
    %cst_5 = arith.constant dense<0.000000e+00> : vector<256x128xf32>
    %6 = tpu.matmul %4, %5, %cst_5 {dimension_numbers = #tpu.dot_dimension_numbers<[1], [0], [0], [1], [0, 0, 1, 1], [], []>} : vector<256x128xbf16>, vector<128x128xbf16>, vector<256x128xf32> -> vector<256x128xf32>
    %cst_6 = arith.constant 9.99999971E-10 : f32
    %7 = vector.broadcast %cst_6 : f32 to vector<256x128xf32>
    %8 = arith.addf %6, %7 : vector<256x128xf32>
    %9 = math.rsqrt %8 : vector<256x128xf32>
    %10 = arith.mulf %6, %9 : vector<256x128xf32>
    %cst_7 = arith.constant 1.000000e+00 : f32
    %11 = vector.broadcast %cst_7 : f32 to vector<256x128xf32>
    %12 = arith.addf %11, %6 : vector<256x128xf32>
    %13 = tpu.reciprocal %12 {approx = true} : vector<256x128xf32> -> vector<256x128xf32>
    %14 = arith.mulf %10, %13 : vector<256x128xf32>
    %15 = arith.mulf %2, %14 : vector<256x128xf32>
    %c0_8 = arith.constant 0 : index
    %c0_9 = arith.constant 0 : index
    %16 = vector.load %arg3[%c0_8, %c0_9] : memref<256x128xf32, #tpu.memory_space<vmem>>, vector<256x128xf32>
    tpu.vector_store %arg3[%c0_8, %c0_9], %15 {strides = array<i32>} : memref<256x128xf32, #tpu.memory_space<vmem>>, vector<256x128xf32>,
    return
  }
}

</mosaic_0001>

<llo_original>
// kernel: primary_caps_forward.1
$region0: #{primary_caps_forward.1}
  #allocation0 [shape = 'u32[]', space=smem, size = 0x4, offset = 0x4, fixed_abs, tag = 'smem constant byte address 0x4 - core index']
  #allocation1 [shape = 'u32[144,128]{1,0:T(1,128)}', space=vmem, size = 0x12000, scoped, tag = 'internal scratch']
  %s0 = inlined_call_operand.vmem [shape: bf16[37,128], index: 0, kind: input, shape index: {}]
  %s1 = inlined_call_operand.vmem [shape: bf16[256,37], index: 1, kind: input, shape index: {}]
  %s2 = inlined_call_operand.vmem [shape: bf16[128,128], index: 2, kind: input, shape index: {}]
  %s3 = inlined_call_operand.vmem [shape: f32[256,128], index: 3, kind: output, shape index: {}]
  %s4 = sld [smem:[#allocation0]]
  $region22: #{primary_caps_forward.1} parent=0
    _
  %s6 = ssub.s32 1, %s4
  %s7 = scalar_select 0, %s6, %s4
  // Predicated region
  $region2: #{primary_caps_forward.1} parent=0 // pred_check
    _
  $region3: #{primary_caps_forward.1} parent=0 // pred_check_branch
    %9 = sbr.rel (0) target = $region5
  $region4: #{primary_caps_forward.1} parent=0 // pred_region
    _
  $region5: #{primary_caps_forward.1} parent=0 // pred_fallthru
    _
  // Predicated region
  $region6: #{primary_caps_forward.1} parent=0 // pred_check
    _
  $region7: #{primary_caps_forward.1} parent=0 // pred_check_branch
    %11 = sbr.rel (0) target = $region9
  $region8: #{primary_caps_forward.1} parent=0 // pred_region
    _
  $region9: #{primary_caps_forward.1} parent=0 // pred_fallthru
    _
  // Predicated region
  $region10: #{primary_caps_forward.1} parent=0 // pred_check
    _
  $region11: #{primary_caps_forward.1} parent=0 // pred_check_branch
    %13 = sbr.rel (0) target = $region13
  $region12: #{primary_caps_forward.1} parent=0 // pred_region
    _
  $region13: #{primary_caps_forward.1} parent=0 // pred_fallthru
    _
  %v15 = vld [vmem:[%s1] sm:$0xf]
  %v16 = vld [vmem:[%s1 + $0x4] sm:$0xf]
  %v17 = vld [vmem:[%s1 + $0x8] sm:$0xf]
  %v18 = vld [vmem:[%s1 + $0xc] sm:$0xf]
  %v19 = vld [vmem:[%s1 + $0x10] sm:$0xf]
  %v20 = vld [vmem:[%s1 + $0x14] sm:$0xf]
  %v21 = vld [vmem:[%s1 + $0x18] sm:$0xf]
  %v22 = vld [vmem:[%s1 + $0x1c] sm:$0xf]
  %v23 = vld [vmem:[%s1 + $0x20] sm:$0xf]
  %v24 = vld [vmem:[%s1 + $0x24] sm:$0xf]
  %v25 = vld [vmem:[%s1 + $0x28] sm:$0xf]
  %v26 = vld [vmem:[%s1 + $0x2c] sm:$0xf]
  %v27 = vld [vmem:[%s1 + $0x30] sm:$0xf]
  %v28 = vld [vmem:[%s1 + $0x34] sm:$0xf]
  %v29 = vld [vmem:[%s1 + $0x38] sm:$0xf]
  %v30 = vld [vmem:[%s1 + $0x3c] sm:$0xf]
  %v31 = vld [vmem:[%s1 + $0x40] sm:$0xf]
  %v32 = vld [vmem:[%s1 + $0x44] sm:$0xf]
  %v33 = vld [vmem:[%s1 + $0x48] sm:$0xf]
  %v34 = vld [vmem:[%s1 + $0x4c] sm:$0xf]
  %v35 = vld [vmem:[%s1 + $0x50] sm:$0xf]
  %v36 = vld [vmem:[%s1 + $0x54] sm:$0xf]
  %v37 = vld [vmem:[%s1 + $0x58] sm:$0xf]
  %v38 = vld [vmem:[%s1 + $0x5c] sm:$0xf]
  %v39 = vld [vmem:[%s1 + $0x60] sm:$0xf]
  %v40 = vld [vmem:[%s1 + $0x64] sm:$0xf]
  %v41 = vld [vmem:[%s1 + $0x68] sm:$0xf]
  %v42 = vld [vmem:[%s1 + $0x6c] sm:$0xf]
  %v43 = vld [vmem:[%s1 + $0x70] sm:$0xf]
  %v44 = vld [vmem:[%s1 + $0x74] sm:$0xf]
  %v45 = vld [vmem:[%s1 + $0x78] sm:$0xf]
  %v46 = vld [vmem:[%s1 + $0x7c] sm:$0xf]
  %v47 = vld [vmem:[%s0] sm:$0xf]
  %v48 = vld [vmem:[%s0 + $0x4] sm:$0xf]
  %v49 = vld [vmem:[%s0 + $0x8] sm:$0xf]
  %v50 = vld [vmem:[%s0 + $0xc] sm:$0xf]
  %v51 = vld [vmem:[%s0 + $0x10] sm:$0x7]
  %v84 = vunpack.c.l.b16 %v15
  %v85 = vunpack.c.l.b16 %v16
  %v86 = vunpack.c.l.b16 %v17
  %v87 = vunpack.c.l.b16 %v18
  %v88 = vunpack.c.l.b16 %v19
  %v89 = vunpack.c.l.b16 %v20
  %v90 = vunpack.c.l.b16 %v21
  %v91 = vunpack.c.l.b16 %v22
  %v92 = vunpack.c.l.b16 %v23
  %v93 = vunpack.c.l.b16 %v24
  %v94 = vunpack.c.l.b16 %v25
  %v95 = vunpack.c.l.b16 %v26
  %v96 = vunpack.c.l.b16 %v27
  %v97 = vunpack.c.l.b16 %v28
  %v98 = vunpack.c.l.b16 %v29
  %v99 = vunpack.c.l.b16 %v30
  %v100 = vunpack.c.l.b16 %v31
  %v101 = vunpack.c.l.b16 %v32
  %v102 = vunpack.c.l.b16 %v33
  %v103 = vunpack.c.l.b16 %v34
  %v104 = vunpack.c.l.b16 %v35
  %v105 = vunpack.c.l.b16 %v36
  %v106 = vunpack.c.l.b16 %v37
  %v107 = vunpack.c.l.b16 %v38
  %v108 = vunpack.c.l.b16 %v39
  %v109 = vunpack.c.l.b16 %v40
  %v110 = vunpack.c.l.b16 %v41
  %v111 = vunpack.c.l.b16 %v42
  %v112 = vunpack.c.l.b16 %v43
  %v113 = vunpack.c.l.b16 %v44
  %v114 = vunpack.c.l.b16 %v45
  %v115 = vunpack.c.l.b16 %v46
  %v116 = vpack.c.b16 %v85, %v84
  %v117 = vpack.c.b16 %v87, %v86
  %v118 = vpack.c.b16 %v89, %v88
  %v119 = vpack.c.b16 %v91, %v90
  %v120 = vpack.c.b16 %v93, %v92
  %v121 = vpack.c.b16 %v95, %v94
  %v122 = vpack.c.b16 %v97, %v96
  %v123 = vpack.c.b16 %v99, %v98
  %v124 = vpack.c.b16 %v101, %v100
  %v125 = vpack.c.b16 %v103, %v102
  %v126 = vpack.c.b16 %v105, %v104
  %v127 = vpack.c.b16 %v107, %v106
  %v128 = vpack.c.b16 %v109, %v108
  %v129 = vpack.c.b16 %v111, %v110
  %v130 = vpack.c.b16 %v113, %v112
  %v131 = vpack.c.b16 %v115, %v114
  %v137 = vunpack.c.l.b16 %v47
  %v138 = vunpack.c.l.b16 %v48
  %v139 = vunpack.c.l.b16 %v49
  %v140 = vunpack.c.l.b16 %v50
  %v141 = vunpack.c.l.b16 %v51
  %v142 = vpack.c.b16 %v138, %v137
  %v143 = vpack.c.b16 %v140, %v139
  %v144 = vpack.c.b16 %v141, %v141
  %vm147 = vcmask 302080
  %v149 = vsel %vm147, %v116, 0
  %v152 = vsel %vm147, %v117, 0
  %v155 = vsel %vm147, %v118, 0
  %v158 = vsel %vm147, %v119, 0
  %v161 = vsel %vm147, %v120, 0
  %v164 = vsel %vm147, %v121, 0
  %v167 = vsel %vm147, %v122, 0
  %v170 = vsel %vm147, %v123, 0
  %v173 = vsel %vm147, %v124, 0
  %v176 = vsel %vm147, %v125, 0
  %v179 = vsel %vm147, %v126, 0
  %v182 = vsel %vm147, %v127, 0
  %v185 = vsel %vm147, %v128, 0
  %v188 = vsel %vm147, %v129, 0
  %v191 = vsel %vm147, %v130, 0
  %v194 = vsel %vm147, %v131, 0
  %vm196 = vcmask 1041408
  %vm197 = vcmask 1042432
  %v198 = vsel %vm196, 4294967295, 65535
  %v199 = vsel %vm197, %v198, 0
  %v201 = vand.u32 %v144, %v199
  %203 = vmatprep.subr.bf16.mxu0 0
  %204 = vmatpush1.bf16.msra.mxu0 %v142
  %205 = vmatprep.subr.bf16.mxu0 0
  %206 = vmatpush1.bf16.msra.mxu0 %v143
  %207 = vmatprep.subr.bf16.mxu0 0
  %208 = vmatpush1.bf16.msra.mxu0 %v201
  %209 = vmatprep.subr.bf16.mxu0 0
  %210 = vmatpush1.bf16.msra.mxu0 0
  %211 = vmatprep.subr.bf16.mxu0 0
  %212 = vmatpush1.bf16.msra.mxu0 0
  %213 = vmatprep.subr.bf16.mxu0 0
  %214 = vmatpush1.bf16.msra.mxu0 0
  %215 = vmatprep.subr.bf16.mxu0 0
  %216 = vmatpush1.bf16.msra.mxu0 0
  %217 = vmatprep.subr.bf16.mxu0 0
  %218 = vmatpush1.bf16.msra.mxu0 0
  %219 = vmatprep.subr.bf16.mxu0 0
  %220 = vmatpush1.bf16.msra.mxu0 0
  %221 = vmatprep.subr.bf16.mxu0 0
  %222 = vmatpush1.bf16.msra.mxu0 0
  %223 = vmatprep.subr.bf16.mxu0 0
  %224 = vmatpush1.bf16.msra.mxu0 0
  %225 = vmatprep.subr.bf16.mxu0 0
  %226 = vmatpush1.bf16.msra.mxu0 0
  %227 = vmatprep.subr.bf16.mxu0 0
  %228 = vmatpush1.bf16.msra.mxu0 0
  %229 = vmatprep.subr.bf16.mxu0 0
  %230 = vmatpush1.bf16.msra.mxu0 0
  %231 = vmatprep.subr.bf16.mxu0 0
  %232 = vmatpush1.bf16.msra.mxu0 0
  %233 = vmatprep.subr.bf16.mxu0 0
  %234 = vmatpush1.bf16.msra.mxu0 0
  %235 = vmatprep.mubr.bf16.mxu0 0
  %236 = vmatmul.mubr.bf16.gmra.mrb[0].mxu0 %v149
  %v237 = vpop.f32.mrb[0].mxu0
  %v238 = vadd.f32 0.0, %v237
  %v239 = vpop.f32.mrb[0].mxu0
  %v240 = vpop.f32.mrb[0].mxu0
  %v241 = vadd.f32 0.0, %v240
  %v242 = vpop.f32.mrb[0].mxu0
  %243 = vmatprep.mubr.bf16.mxu0 0
  %244 = vmatmul.mubr.bf16.gmra.mrb[0].mxu0 %v152
  %v245 = vpop.f32.mrb[0].mxu0
  %v246 = vadd.f32 0.0, %v245
  %v247 = vpop.f32.mrb[0].mxu0
  %v248 = vpop.f32.mrb[0].mxu0
  %v249 = vadd.f32 0.0, %v248
  %v250 = vpop.f32.mrb[0].mxu0
  %251 = vmatprep.mubr.bf16.mxu0 0
  %252 = vmatmul.mubr.bf16.gmra.mrb[0].mxu0 %v155
  %v253 = vpop.f32.mrb[0].mxu0
  %v254 = vadd.f32 0.0, %v253
  %v255 = vpop.f32.mrb[0].mxu0
  %v256 = vpop.f32.mrb[0].mxu0
  %v257 = vadd.f32 0.0, %v256
  %v258 = vpop.f32.mrb[0].mxu0
  %259 = vmatprep.mubr.bf16.mxu0 0
  %260 = vmatmul.mubr.bf16.gmra.mrb[0].mxu0 %v158
  %v261 = vpop.f32.mrb[0].mxu0
  %v262 = vadd.f32 0.0, %v261
  %v263 = vpop.f32.mrb[0].mxu0
  %v264 = vpop.f32.mrb[0].mxu0
  %v265 = vadd.f32 0.0, %v264
  %v266 = vpop.f32.mrb[0].mxu0
  %267 = vmatprep.mubr.bf16.mxu0 0
  %268 = vmatmul.mubr.bf16.gmra.mrb[0].mxu0 %v161
  %v269 = vpop.f32.mrb[0].mxu0
  %v270 = vadd.f32 0.0, %v269
  %v271 = vpop.f32.mrb[0].mxu0
  %v272 = vpop.f32.mrb[0].mxu0
  %v273 = vadd.f32 0.0, %v272
  %v274 = vpop.f32.mrb[0].mxu0
  %275 = vmatprep.mubr.bf16.mxu0 0
  %276 = vmatmul.mubr.bf16.gmra.mrb[0].mxu0 %v164
  %v277 = vpop.f32.mrb[0].mxu0
  %v278 = vadd.f32 0.0, %v277
  %v279 = vpop.f32.mrb[0].mxu0
  %v280 = vpop.f32.mrb[0].mxu0
  %v281 = vadd.f32 0.0, %v280
  %v282 = vpop.f32.mrb[0].mxu0
  %283 = vmatprep.mubr.bf16.mxu0 0
  %284 = vmatmul.mubr.bf16.gmra.mrb[0].mxu0 %v167
  %v285 = vpop.f32.mrb[0].mxu0
  %v286 = vadd.f32 0.0, %v285
  %v287 = vpop.f32.mrb[0].mxu0
  %v288 = vpop.f32.mrb[0].mxu0
  %v289 = vadd.f32 0.0, %v288
  %v290 = vpop.f32.mrb[0].mxu0
  %291 = vmatprep.mubr.bf16.mxu0 0
  %292 = vmatmul.mubr.bf16.gmra.mrb[0].mxu0 %v170
  %v293 = vpop.f32.mrb[0].mxu0
  %v294 = vadd.f32 0.0, %v293
  %v295 = vpop.f32.mrb[0].mxu0
  %v296 = vpop.f32.mrb[0].mxu0
  %v297 = vadd.f32 0.0, %v296
  %v298 = vpop.f32.mrb[0].mxu0
  %299 = vmatprep.mubr.bf16.mxu0 0
  %300 = vmatmul.mubr.bf16.gmra.mrb[0].mxu0 %v173
  %v301 = vpop.f32.mrb[0].mxu0
  %v302 = vadd.f32 0.0, %v301
  %v303 = vpop.f32.mrb[0].mxu0
  %v304 = vpop.f32.mrb[0].mxu0
  %v305 = vadd.f32 0.0, %v304
  %v306 = vpop.f32.mrb[0].mxu0
  %307 = vmatprep.mubr.bf16.mxu0 0
  %308 = vmatmul.mubr.bf16.gmra.mrb[0].mxu0 %v176
  %v309 = vpop.f32.mrb[0].mxu0
  %v310 = vadd.f32 0.0, %v309
  %v311 = vpop.f32.mrb[0].mxu0
  %v312 = vpop.f32.mrb[0].mxu0
  %v313 = vadd.f32 0.0, %v312
  %v314 = vpop.f32.mrb[0].mxu0
  %315 = vmatprep.mubr.bf16.mxu0 0
  %316 = vmatmul.mubr.bf16.gmra.mrb[0].mxu0 %v179
  %v317 = vpop.f32.mrb[0].mxu0
  %v318 = vadd.f32 0.0, %v317
  %v319 = vpop.f32.mrb[0].mxu0
  %v320 = vpop.f32.mrb[0].mxu0
  %v321 = vadd.f32 0.0, %v320
  %v322 = vpop.f32.mrb[0].mxu0
  %323 = vmatprep.mubr.bf16.mxu0 0
  %324 = vmatmul.mubr.bf16.gmra.mrb[0].mxu0 %v182
  %v325 = vpop.f32.mrb[0].mxu0
  %v326 = vadd.f32 0.0, %v325
  %v327 = vpop.f32.mrb[0].mxu0
  %v328 = vpop.f32.mrb[0].mxu0
  %v329 = vadd.f32 0.0, %v328
  %v330 = vpop.f32.mrb[0].mxu0
  %331 = vmatprep.mubr.bf16.mxu0 0
  %332 = vmatmul.mubr.bf16.gmra.mrb[0].mxu0 %v185
  %v333 = vpop.f32.mrb[0].mxu0
  %v334 = vadd.f32 0.0, %v333
  %v335 = vpop.f32.mrb[0].mxu0
  %v336 = vpop.f32.mrb[0].mxu0
  %v337 = vadd.f32 0.0, %v336
  %v338 = vpop.f32.mrb[0].mxu0
  %339 = vmatprep.mubr.bf16.mxu0 0
  %340 = vmatmul.mubr.bf16.gmra.mrb[0].mxu0 %v188
  %v341 = vpop.f32.mrb[0].mxu0
  %v342 = vadd.f32 0.0, %v341
  %v343 = vpop.f32.mrb[0].mxu0
  %v344 = vpop.f32.mrb[0].mxu0
  %v345 = vadd.f32 0.0, %v344
  %v346 = vpop.f32.mrb[0].mxu0
  %347 = vmatprep.mubr.bf16.mxu0 0
  %348 = vmatmul.mubr.bf16.gmra.mrb[0].mxu0 %v191
  %v349 = vpop.f32.mrb[0].mxu0
  %v350 = vadd.f32 0.0, %v349
  %v351 = vpop.f32.mrb[0].mxu0
  %v352 = vpop.f32.mrb[0].mxu0
  %v353 = vadd.f32 0.0, %v352
  %v354 = vpop.f32.mrb[0].mxu0
  %355 = vmatprep.mubr.bf16.mxu0 0
  %356 = vmatmul.mubr.bf16.gmra.mrb[0].mxu0 %v194
  %v357 = vpop.f32.mrb[0].mxu0
  %v358 = vadd.f32 0.0, %v357
  %v359 = vpop.f32.mrb[0].mxu0
  %v360 = vpop.f32.mrb[0].mxu0
  %v361 = vadd.f32 0.0, %v360
  %v362 = vpop.f32.mrb[0].mxu0
  %363 = vdwg.mxu0
  %v364 = vmul.f32 %v238, %v238
  %v365 = vmul.f32 %v241, %v241
  %v366 = vmul.f32 %v246, %v246
  %v367 = vmul.f32 %v249, %v249
  %v368 = vmul.f32 %v254, %v254
  %v369 = vmul.f32 %v257, %v257
  %v370 = vmul.f32 %v262, %v262
  %v371 = vmul.f32 %v265, %v265
  %v372 = vmul.f32 %v270, %v270
  %v373 = vmul.f32 %v273, %v273
  %v374 = vmul.f32 %v278, %v278
  %v375 = vmul.f32 %v281, %v281
  %v376 = vmul.f32 %v286, %v286
  %v377 = vmul.f32 %v289, %v289
  %v378 = vmul.f32 %v294, %v294
  %v379 = vmul.f32 %v297, %v297
  %v380 = vmul.f32 %v302, %v302
  %v381 = vmul.f32 %v305, %v305
  %v382 = vmul.f32 %v310, %v310
  %v383 = vmul.f32 %v313, %v313
  %v384 = vmul.f32 %v318, %v318
  %v385 = vmul.f32 %v321, %v321
  %v386 = vmul.f32 %v326, %v326
  %v387 = vmul.f32 %v329, %v329
  %v388 = vmul.f32 %v334, %v334
  %v389 = vmul.f32 %v337, %v337
  %v390 = vmul.f32 %v342, %v342
  %v391 = vmul.f32 %v345, %v345
  %v392 = vmul.f32 %v350, %v350
  %v393 = vmul.f32 %v353, %v353
  %v394 = vmul.f32 %v358, %v358
  %v395 = vmul.f32 %v361, %v361
  %v396 = vpack.c.bf16 %v365, %v364
  %v397 = vpack.c.bf16 %v367, %v366
  %v398 = vpack.c.bf16 %v369, %v368
  %v399 = vpack.c.bf16 %v371, %v370
  %v400 = vpack.c.bf16 %v373, %v372
  %v401 = vpack.c.bf16 %v375, %v374
  %v402 = vpack.c.bf16 %v377, %v376
  %v403 = vpack.c.bf16 %v379, %v378
  %v404 = vpack.c.bf16 %v381, %v380
  %v405 = vpack.c.bf16 %v383, %v382
  %v406 = vpack.c.bf16 %v385, %v384
  %v407 = vpack.c.bf16 %v387, %v386
  %v408 = vpack.c.bf16 %v389, %v388
  %v409 = vpack.c.bf16 %v391, %v390
  %v410 = vpack.c.bf16 %v393, %v392
  %v411 = vpack.c.bf16 %v395, %v394
  %v412 = vld [vmem:[%s2] sm:$0xf]
  %v413 = vld [vmem:[%s2 + $0x4] sm:$0xf]
  %v414 = vld [vmem:[%s2 + $0x8] sm:$0xf]
  %v415 = vld [vmem:[%s2 + $0xc] sm:$0xf]
  %v416 = vld [vmem:[%s2 + $0x10] sm:$0xf]
  %v417 = vld [vmem:[%s2 + $0x14] sm:$0xf]
  %v418 = vld [vmem:[%s2 + $0x18] sm:$0xf]
  %v419 = vld [vmem:[%s2 + $0x1c] sm:$0xf]
  %v420 = vld [vmem:[%s2 + $0x20] sm:$0xf]
  %v421 = vld [vmem:[%s2 + $0x24] sm:$0xf]
  %v422 = vld [vmem:[%s2 + $0x28] sm:$0xf]
  %v423 = vld [vmem:[%s2 + $0x2c] sm:$0xf]
  %v424 = vld [vmem:[%s2 + $0x30] sm:$0xf]
  %v425 = vld [vmem:[%s2 + $0x34] sm:$0xf]
  %v426 = vld [vmem:[%s2 + $0x38] sm:$0xf]
  %v427 = vld [vmem:[%s2 + $0x3c] sm:$0xf]
  %v444 = vunpack.c.l.b16 %v412
  %v445 = vunpack.c.l.b16 %v413
  %v446 = vunpack.c.l.b16 %v414
  %v447 = vunpack.c.l.b16 %v415
  %v448 = vunpack.c.l.b16 %v416
  %v449 = vunpack.c.l.b16 %v417
  %v450 = vunpack.c.l.b16 %v418
  %v451 = vunpack.c.l.b16 %v419
  %v452 = vunpack.c.l.b16 %v420
  %v453 = vunpack.c.l.b16 %v421
  %v454 = vunpack.c.l.b16 %v422
  %v455 = vunpack.c.l.b16 %v423
  %v456 = vunpack.c.l.b16 %v424
  %v457 = vunpack.c.l.b16 %v425
  %v458 = vunpack.c.l.b16 %v426
  %v459 = vunpack.c.l.b16 %v427
  %v460 = vpack.c.b16 %v445, %v444
  %v461 = vpack.c.b16 %v447, %v446
  %v462 = vpack.c.b16 %v449, %v448
  %v463 = vpack.c.b16 %v451, %v450
  %v464 = vpack.c.b16 %v453, %v452
  %v465 = vpack.c.b16 %v455, %v454
  %v466 = vpack.c.b16 %v457, %v456
  %v467 = vpack.c.b16 %v459, %v458
  %476 = vmatprep.subr.bf16.mxu0 0
  %477 = vmatpush1.bf16.msra.mxu0 %v460
  %478 = vmatprep.subr.bf16.mxu0 0
  %479 = vmatpush1.bf16.msra.mxu0 %v461
  %480 = vmatprep.subr.bf16.mxu0 0
  %481 = vmatpush1.bf16.msra.mxu0 %v462
  %482 = vmatprep.subr.bf16.mxu0 0
  %483 = vmatpush1.bf16.msra.mxu0 %v463
  %484 = vmatprep.subr.bf16.mxu0 0
  %485 = vmatpush1.bf16.msra.mxu0 %v464
  %486 = vmatprep.subr.bf16.mxu0 0
  %487 = vmatpush1.bf16.msra.mxu0 %v465
  %488 = vmatprep.subr.bf16.mxu0 0
  %489 = vmatpush1.bf16.msra.mxu0 %v466
  %490 = vmatprep.subr.bf16.mxu0 0
  %491 = vmatpush1.bf16.msra.mxu0 %v467
  %492 = vmatprep.subr.bf16.mxu0 0
  %493 = vmatpush1.bf16.msra.mxu0 0
  %494 = vmatprep.subr.bf16.mxu0 0
  %495 = vmatpush1.bf16.msra.mxu0 0
  %496 = vmatprep.subr.bf16.mxu0 0
  %497 = vmatpush1.bf16.msra.mxu0 0
  %498 = vmatprep.subr.bf16.mxu0 0
  %499 = vmatpush1.bf16.msra.mxu0 0
  %500 = vmatprep.subr.bf16.mxu0 0
  %501 = vmatpush1.bf16.msra.mxu0 0
  %502 = vmatprep.subr.bf16.mxu0 0
  %503 = vmatpush1.bf16.msra.mxu0 0
  %504 = vmatprep.subr.bf16.mxu0 0
  %505 = vmatpush1.bf16.msra.mxu0 0
  %506 = vmatprep.subr.bf16.mxu0 0
  %507 = vmatpush1.bf16.msra.mxu0 0
  %508 = vmatprep.mubr.bf16.mxu0 0
  %509 = vmatmul.mubr.bf16.gmra.mrb[0].mxu0 %v396
  %v510 = vpop.f32.mrb[0].mxu0
  %v511 = vadd.f32 0.0, %v510
  %v512 = vpop.f32.mrb[0].mxu0
  %v513 = vpop.f32.mrb[0].mxu0
  %v514 = vadd.f32 0.0, %v513
  %v515 = vpop.f32.mrb[0].mxu0
  %516 = vmatprep.mubr.bf16.mxu0 0
  %517 = vmatmul.mubr.bf16.gmra.mrb[0].mxu0 %v397
  %v518 = vpop.f32.mrb[0].mxu0
  %v519 = vadd.f32 0.0, %v518
  %v520 = vpop.f32.mrb[0].mxu0
  %v521 = vpop.f32.mrb[0].mxu0
  %v522 = vadd.f32 0.0, %v521
  %v523 = vpop.f32.mrb[0].mxu0
  %524 = vmatprep.mubr.bf16.mxu0 0
  %525 = vmatmul.mubr.bf16.gmra.mrb[0].mxu0 %v398
  %v526 = vpop.f32.mrb[0].mxu0
  %v527 = vadd.f32 0.0, %v526
  %v528 = vpop.f32.mrb[0].mxu0
  %v529 = vpop.f32.mrb[0].mxu0
  %v530 = vadd.f32 0.0, %v529
  %v531 = vpop.f32.mrb[0].mxu0
  %532 = vmatprep.mubr.bf16.mxu0 0
  %533 = vmatmul.mubr.bf16.gmra.mrb[0].mxu0 %v399
  %v534 = vpop.f32.mrb[0].mxu0
  %v535 = vadd.f32 0.0, %v534
  %v536 = vpop.f32.mrb[0].mxu0
  %v537 = vpop.f32.mrb[0].mxu0
  %v538 = vadd.f32 0.0, %v537
  %v539 = vpop.f32.mrb[0].mxu0
  %540 = vmatprep.mubr.bf16.mxu0 0
  %541 = vmatmul.mubr.bf16.gmra.mrb[0].mxu0 %v400
  %v542 = vpop.f32.mrb[0].mxu0
  %v543 = vadd.f32 0.0, %v542
  %v544 = vpop.f32.mrb[0].mxu0
  %v545 = vpop.f32.mrb[0].mxu0
  %v546 = vadd.f32 0.0, %v545
  %v547 = vpop.f32.mrb[0].mxu0
  %548 = vmatprep.mubr.bf16.mxu0 0
  %549 = vmatmul.mubr.bf16.gmra.mrb[0].mxu0 %v401
  %v550 = vpop.f32.mrb[0].mxu0
  %v551 = vadd.f32 0.0, %v550
  %v552 = vpop.f32.mrb[0].mxu0
  %v553 = vpop.f32.mrb[0].mxu0
  %v554 = vadd.f32 0.0, %v553
  %v555 = vpop.f32.mrb[0].mxu0
  %556 = vmatprep.mubr.bf16.mxu0 0
  %557 = vmatmul.mubr.bf16.gmra.mrb[0].mxu0 %v402
  %v558 = vpop.f32.mrb[0].mxu0
  %v559 = vadd.f32 0.0, %v558
  %v560 = vpop.f32.mrb[0].mxu0
  %v561 = vpop.f32.mrb[0].mxu0
  %v562 = vadd.f32 0.0, %v561
  %v563 = vpop.f32.mrb[0].mxu0
  %564 = vmatprep.mubr.bf16.mxu0 0
  %565 = vmatmul.mubr.bf16.gmra.mrb[0].mxu0 %v403
  %v566 = vpop.f32.mrb[0].mxu0
  %v567 = vadd.f32 0.0, %v566
  %v568 = vpop.f32.mrb[0].mxu0
  %v569 = vpop.f32.mrb[0].mxu0
  %v570 = vadd.f32 0.0, %v569
  %v571 = vpop.f32.mrb[0].mxu0
  %572 = vmatprep.mubr.bf16.mxu0 0
  %573 = vmatmul.mubr.bf16.gmra.mrb[0].mxu0 %v404
  %v574 = vpop.f32.mrb[0].mxu0
  %v575 = vadd.f32 0.0, %v574
  %v576 = vpop.f32.mrb[0].mxu0
  %v577 = vpop.f32.mrb[0].mxu0
  %v578 = vadd.f32 0.0, %v577
  %v579 = vpop.f32.mrb[0].mxu0
  %580 = vmatprep.mubr.bf16.mxu0 0
  %581 = vmatmul.mubr.bf16.gmra.mrb[0].mxu0 %v405
  %v582 = vpop.f32.mrb[0].mxu0
  %v583 = vadd.f32 0.0, %v582
  %v584 = vpop.f32.mrb[0].mxu0
  %v585 = vpop.f32.mrb[0].mxu0
  %v586 = vadd.f32 0.0, %v585
  %v587 = vpop.f32.mrb[0].mxu0
  %588 = vmatprep.mubr.bf16.mxu0 0
  %589 = vmatmul.mubr.bf16.gmra.mrb[0].mxu0 %v406
  %v590 = vpop.f32.mrb[0].mxu0
  %v591 = vadd.f32 0.0, %v590
  %v592 = vpop.f32.mrb[0].mxu0
  %v593 = vpop.f32.mrb[0].mxu0
  %v594 = vadd.f32 0.0, %v593
  %v595 = vpop.f32.mrb[0].mxu0
  %596 = vmatprep.mubr.bf16.mxu0 0
  %597 = vmatmul.mubr.bf16.gmra.mrb[0].mxu0 %v407
  %v598 = vpop.f32.mrb[0].mxu0
  %v599 = vadd.f32 0.0, %v598
  %v600 = vpop.f32.mrb[0].mxu0
  %v601 = vpop.f32.mrb[0].mxu0
  %v602 = vadd.f32 0.0, %v601
  %v603 = vpop.f32.mrb[0].mxu0
  %604 = vmatprep.mubr.bf16.mxu0 0
  %605 = vmatmul.mubr.bf16.gmra.mrb[0].mxu0 %v408
  %v606 = vpop.f32.mrb[0].mxu0
  %v607 = vadd.f32 0.0, %v606
  %v608 = vpop.f32.mrb[0].mxu0
  %v609 = vpop.f32.mrb[0].mxu0
  %v610 = vadd.f32 0.0, %v609
  %v611 = vpop.f32.mrb[0].mxu0
  %612 = vmatprep.mubr.bf16.mxu0 0
  %613 = vmatmul.mubr.bf16.gmra.mrb[0].mxu0 %v409
  %v614 = vpop.f32.mrb[0].mxu0
  %v615 = vadd.f32 0.0, %v614
  %v616 = vpop.f32.mrb[0].mxu0
  %v617 = vpop.f32.mrb[0].mxu0
  %v618 = vadd.f32 0.0, %v617
  %v619 = vpop.f32.mrb[0].mxu0
  %620 = vmatprep.mubr.bf16.mxu0 0
  %621 = vmatmul.mubr.bf16.gmra.mrb[0].mxu0 %v410
  %v622 = vpop.f32.mrb[0].mxu0
  %v623 = vadd.f32 0.0, %v622
  %v624 = vpop.f32.mrb[0].mxu0
  %v625 = vpop.f32.mrb[0].mxu0
  %v626 = vadd.f32 0.0, %v625
  %v627 = vpop.f32.mrb[0].mxu0
  %628 = vmatprep.mubr.bf16.mxu0 0
  %629 = vmatmul.mubr.bf16.gmra.mrb[0].mxu0 %v411
  %v630 = vpop.f32.mrb[0].mxu0
  %v631 = vadd.f32 0.0, %v630
  %v632 = vpop.f32.mrb[0].mxu0
  %v633 = vpop.f32.mrb[0].mxu0
  %v634 = vadd.f32 0.0, %v633
  %v635 = vpop.f32.mrb[0].mxu0
  %636 = vdwg.mxu0
  %v637 = vadd.f32 %v511, 1e-09
  %v638 = vadd.f32 %v514, 1e-09
  %v639 = vadd.f32 %v519, 1e-09
  %v640 = vadd.f32 %v522, 1e-09
  %v641 = vadd.f32 %v527, 1e-09
  %v642 = vadd.f32 %v530, 1e-09
  %v643 = vadd.f32 %v535, 1e-09
  %v644 = vadd.f32 %v538, 1e-09
  %v645 = vadd.f32 %v543, 1e-09
  %v646 = vadd.f32 %v546, 1e-09
  %v647 = vadd.f32 %v551, 1e-09
  %v648 = vadd.f32 %v554, 1e-09
  %v649 = vadd.f32 %v559, 1e-09
  %v650 = vadd.f32 %v562, 1e-09
  %v651 = vadd.f32 %v567, 1e-09
  %v652 = vadd.f32 %v570, 1e-09
  %v653 = vadd.f32 %v575, 1e-09
  %v654 = vadd.f32 %v578, 1e-09
  %v655 = vadd.f32 %v583, 1e-09
  %v656 = vadd.f32 %v586, 1e-09
  %v657 = vadd.f32 %v591, 1e-09
  %v658 = vadd.f32 %v594, 1e-09
  %v659 = vadd.f32 %v599, 1e-09
  %v660 = vadd.f32 %v602, 1e-09
  %v661 = vadd.f32 %v607, 1e-09
  %v662 = vadd.f32 %v610, 1e-09
  %v663 = vadd.f32 %v615, 1e-09
  %v664 = vadd.f32 %v618, 1e-09
  %v665 = vadd.f32 %v623, 1e-09
  %v666 = vadd.f32 %v626, 1e-09
  %v667 = vadd.f32 %v631, 1e-09
  %v668 = vadd.f32 %v634, 1e-09
  %v669 = vrsqrt.pop %v637
  %v670 = vrsqrt.pop %v638
  %v671 = vrsqrt.pop %v639
  %v672 = vrsqrt.pop %v640
  %v673 = vrsqrt.pop %v641
  %v674 = vrsqrt.pop %v642
  %v675 = vrsqrt.pop %v643
  %v676 = vrsqrt.pop %v644
  %v677 = vrsqrt.pop %v645
  %v678 = vrsqrt.pop %v646
  %v679 = vrsqrt.pop %v647
  %v680 = vrsqrt.pop %v648
  %v681 = vrsqrt.pop %v649
  %v682 = vrsqrt.pop %v650
  %v683 = vrsqrt.pop %v651
  %v684 = vrsqrt.pop %v652
  %v685 = vrsqrt.pop %v653
  %v686 = vrsqrt.pop %v654
  %v687 = vrsqrt.pop %v655
  %v688 = vrsqrt.pop %v656
  %v689 = vrsqrt.pop %v657
  %v690 = vrsqrt.pop %v658
  %v691 = vrsqrt.pop %v659
  %v692 = vrsqrt.pop %v660
  %v693 = vrsqrt.pop %v661
  %v694 = vrsqrt.pop %v662
  %v695 = vrsqrt.pop %v663
  %v696 = vrsqrt.pop %v664
  %v697 = vrsqrt.pop %v665
  %v698 = vrsqrt.pop %v666
  %v699 = vrsqrt.pop %v667
  %v700 = vrsqrt.pop %v668
  %v701 = vmul.f32 %v511, %v669
  %v702 = vmul.f32 %v514, %v670
  %v703 = vmul.f32 %v519, %v671
  %v704 = vmul.f32 %v522, %v672
  %v705 = vmul.f32 %v527, %v673
  %v706 = vmul.f32 %v530, %v674
  %v707 = vmul.f32 %v535, %v675
  %v708 = vmul.f32 %v538, %v676
  %v709 = vmul.f32 %v543, %v677
  %v710 = vmul.f32 %v546, %v678
  %v711 = vmul.f32 %v551, %v679
  %v712 = vmul.f32 %v554, %v680
  %v713 = vmul.f32 %v559, %v681
  %v714 = vmul.f32 %v562, %v682
  %v715 = vmul.f32 %v567, %v683
  %v716 = vmul.f32 %v570, %v684
  %v717 = vmul.f32 %v575, %v685
  %v718 = vmul.f32 %v578, %v686
  %v719 = vmul.f32 %v583, %v687
  %v720 = vmul.f32 %v586, %v688
  %v721 = vmul.f32 %v591, %v689
  %v722 = vmul.f32 %v594, %v690
  %v723 = vmul.f32 %v599, %v691
  %v724 = vmul.f32 %v602, %v692
  %v725 = vmul.f32 %v607, %v693
  %v726 = vmul.f32 %v610, %v694
  %v727 = vmul.f32 %v615, %v695
  %v728 = vmul.f32 %v618, %v696
  %v729 = vmul.f32 %v623, %v697
  %v730 = vmul.f32 %v626, %v698
  %v731 = vmul.f32 %v631, %v699
  %v732 = vmul.f32 %v634, %v700
  %v733 = vadd.f32 %v511, 1.0
  %v734 = vadd.f32 %v514, 1.0
  %v735 = vadd.f32 %v519, 1.0
  %v736 = vadd.f32 %v522, 1.0
  %v737 = vadd.f32 %v527, 1.0
  %v738 = vadd.f32 %v530, 1.0
  %v739 = vadd.f32 %v535, 1.0
  %v740 = vadd.f32 %v538, 1.0
  %v741 = vadd.f32 %v543, 1.0
  %v742 = vadd.f32 %v546, 1.0
  %v743 = vadd.f32 %v551, 1.0
  %v744 = vadd.f32 %v554, 1.0
  %v745 = vadd.f32 %v559, 1.0
  %v746 = vadd.f32 %v562, 1.0
  %v747 = vadd.f32 %v567, 1.0
  %v748 = vadd.f32 %v570, 1.0
  %v749 = vadd.f32 %v575, 1.0
  %v750 = vadd.f32 %v578, 1.0
  %v751 = vadd.f32 %v583, 1.0
  %v752 = vadd.f32 %v586, 1.0
  %v753 = vadd.f32 %v591, 1.0
  %v754 = vadd.f32 %v594, 1.0
  %v755 = vadd.f32 %v599, 1.0
  %v756 = vadd.f32 %v602, 1.0
  %v757 = vadd.f32 %v607, 1.0
  %v758 = vadd.f32 %v610, 1.0
  %v759 = vadd.f32 %v615, 1.0
  %v760 = vadd.f32 %v618, 1.0
  %v761 = vadd.f32 %v623, 1.0
  %v762 = vadd.f32 %v626, 1.0
  %v763 = vadd.f32 %v631, 1.0
  %v764 = vadd.f32 %v634, 1.0
  %v765 = vrcp.pop %v733
  %v766 = vrcp.pop %v734
  %v767 = vrcp.pop %v735
  %v768 = vrcp.pop %v736
  %v769 = vrcp.pop %v737
  %v770 = vrcp.pop %v738
  %v771 = vrcp.pop %v739
  %v772 = vrcp.pop %v740
  %v773 = vrcp.pop %v741
  %v774 = vrcp.pop %v742
  %v775 = vrcp.pop %v743
  %v776 = vrcp.pop %v744
  %v777 = vrcp.pop %v745
  %v778 = vrcp.pop %v746
  %v779 = vrcp.pop %v747
  %v780 = vrcp.pop %v748
  %v781 = vrcp.pop %v749
  %v782 = vrcp.pop %v750
  %v783 = vrcp.pop %v751
  %v784 = vrcp.pop %v752
  %v785 = vrcp.pop %v753
  %v786 = vrcp.pop %v754
  %v787 = vrcp.pop %v755
  %v788 = vrcp.pop %v756
  %v789 = vrcp.pop %v757
  %v790 = vrcp.pop %v758
  %v791 = vrcp.pop %v759
  %v792 = vrcp.pop %v760
  %v793 = vrcp.pop %v761
  %v794 = vrcp.pop %v762
  %v795 = vrcp.pop %v763
  %v796 = vrcp.pop %v764
  %v797 = vmul.f32 %v701, %v765
  %v798 = vmul.f32 %v702, %v766
  %v799 = vmul.f32 %v703, %v767
  %v800 = vmul.f32 %v704, %v768
  %v801 = vmul.f32 %v705, %v769
  %v802 = vmul.f32 %v706, %v770
  %v803 = vmul.f32 %v707, %v771
  %v804 = vmul.f32 %v708, %v772
  %v805 = vmul.f32 %v709, %v773
  %v806 = vmul.f32 %v710, %v774
  %v807 = vmul.f32 %v711, %v775
  %v808 = vmul.f32 %v712, %v776
  %v809 = vmul.f32 %v713, %v777
  %v810 = vmul.f32 %v714, %v778
  %v811 = vmul.f32 %v715, %v779
  %v812 = vmul.f32 %v716, %v780
  %v813 = vmul.f32 %v717, %v781
  %v814 = vmul.f32 %v718, %v782
  %v815 = vmul.f32 %v719, %v783
  %v816 = vmul.f32 %v720, %v784
  %v817 = vmul.f32 %v721, %v785
  %v818 = vmul.f32 %v722, %v786
  %v819 = vmul.f32 %v723, %v787
  %v820 = vmul.f32 %v724, %v788
  %v821 = vmul.f32 %v725, %v789
  %v822 = vmul.f32 %v726, %v790
  %v823 = vmul.f32 %v727, %v791
  %v824 = vmul.f32 %v728, %v792
  %v825 = vmul.f32 %v729, %v793
  %v826 = vmul.f32 %v730, %v794
  %v827 = vmul.f32 %v731, %v795
  %v828 = vmul.f32 %v732, %v796
  %v829 = vmul.f32 %v238, %v797
  %v830 = vmul.f32 %v241, %v798
  %v831 = vmul.f32 %v246, %v799
  %v832 = vmul.f32 %v249, %v800
  %v833 = vmul.f32 %v254, %v801
  %v834 = vmul.f32 %v257, %v802
  %v835 = vmul.f32 %v262, %v803
  %v836 = vmul.f32 %v265, %v804
  %v837 = vmul.f32 %v270, %v805
  %v838 = vmul.f32 %v273, %v806
  %v839 = vmul.f32 %v278, %v807
  %v840 = vmul.f32 %v281, %v808
  %v841 = vmul.f32 %v286, %v809
  %v842 = vmul.f32 %v289, %v810
  %v843 = vmul.f32 %v294, %v811
  %v844 = vmul.f32 %v297, %v812
  %v845 = vmul.f32 %v302, %v813
  %v846 = vmul.f32 %v305, %v814
  %v847 = vmul.f32 %v310, %v815
  %v848 = vmul.f32 %v313, %v816
  %v849 = vmul.f32 %v318, %v817
  %v850 = vmul.f32 %v321, %v818
  %v851 = vmul.f32 %v326, %v819
  %v852 = vmul.f32 %v329, %v820
  %v853 = vmul.f32 %v334, %v821
  %v854 = vmul.f32 %v337, %v822
  %v855 = vmul.f32 %v342, %v823
  %v856 = vmul.f32 %v345, %v824
  %v857 = vmul.f32 %v350, %v825
  %v858 = vmul.f32 %v353, %v826
  %v859 = vmul.f32 %v358, %v827
  %v860 = vmul.f32 %v361, %v828
  %861 = vst [vmem:[%s3] sm:$0xff] %v829
  %862 = vst [vmem:[%s3 + $0x8] sm:$0xff] %v830
  %863 = vst [vmem:[%s3 + $0x10] sm:$0xff] %v831
  %864 = vst [vmem:[%s3 + $0x18] sm:$0xff] %v832
  %865 = vst [vmem:[%s3 + $0x20] sm:$0xff] %v833
  %866 = vst [vmem:[%s3 + $0x28] sm:$0xff] %v834
  %867 = vst [vmem:[%s3 + $0x30] sm:$0xff] %v835
  %868 = vst [vmem:[%s3 + $0x38] sm:$0xff] %v836
  %869 = vst [vmem:[%s3 + $0x40] sm:$0xff] %v837
  %870 = vst [vmem:[%s3 + $0x48] sm:$0xff] %v838
  %871 = vst [vmem:[%s3 + $0x50] sm:$0xff] %v839
  %872 = vst [vmem:[%s3 + $0x58] sm:$0xff] %v840
  %873 = vst [vmem:[%s3 + $0x60] sm:$0xff] %v841
  %874 = vst [vmem:[%s3 + $0x68] sm:$0xff] %v842
  %875 = vst [vmem:[%s3 + $0x70] sm:$0xff] %v843
  %876 = vst [vmem:[%s3 + $0x78] sm:$0xff] %v844
  %877 = vst [vmem:[%s3 + $0x80] sm:$0xff] %v845
  %878 = vst [vmem:[%s3 + $0x88] sm:$0xff] %v846
  %879 = vst [vmem:[%s3 + $0x90] sm:$0xff] %v847
  %880 = vst [vmem:[%s3 + $0x98] sm:$0xff] %v848
  %881 = vst [vmem:[%s3 + $0xa0] sm:$0xff] %v849
  %882 = vst [vmem:[%s3 + $0xa8] sm:$0xff] %v850
  %883 = vst [vmem:[%s3 + $0xb0] sm:$0xff] %v851
  %884 = vst [vmem:[%s3 + $0xb8] sm:$0xff] %v852
  %885 = vst [vmem:[%s3 + $0xc0] sm:$0xff] %v853
  %886 = vst [vmem:[%s3 + $0xc8] sm:$0xff] %v854
  %887 = vst [vmem:[%s3 + $0xd0] sm:$0xff] %v855
  %888 = vst [vmem:[%s3 + $0xd8] sm:$0xff] %v856
  %889 = vst [vmem:[%s3 + $0xe0] sm:$0xff] %v857
  %890 = vst [vmem:[%s3 + $0xe8] sm:$0xff] %v858
  %891 = vst [vmem:[%s3 + $0xf0] sm:$0xff] %v859
  %892 = vst [vmem:[%s3 + $0xf8] sm:$0xff] %v860
  // Predicated region
  $region14: #{primary_caps_forward.1} parent=0 // pred_check
    _
  $region15: #{primary_caps_forward.1} parent=0 // pred_check_branch
    %894 = sbr.rel (0) target = $region17
  $region16: #{primary_caps_forward.1} parent=0 // pred_region
    _
  $region17: #{primary_caps_forward.1} parent=0 // pred_fallthru
    _
  // Predicated region
  $region18: #{primary_caps_forward.1} parent=0 // pred_check
    _
  $region19: #{primary_caps_forward.1} parent=0 // pred_check_branch
    %896 = sbr.rel (0) target = $region21
  $region20: #{primary_caps_forward.1} parent=0 // pred_region
    _
  $region21: #{primary_caps_forward.1} parent=0 // pred_fallthru
    _

</llo_original>
